<compile_context>
chip_gen: v6e
topology: v6e:2x2x1
jax: 0.10.0
libtpu: 0.0.40
codegen_flags: <defaults>
</compile_context>

<pallas_src>
import jax
import jax.numpy as jnp
from jax.experimental import pallas as pl
from jax.experimental.pallas import tpu as pltpu


def _round_up(x, m):
    return ((x + m - 1) // m) * m


def _layout(l_obs, n_action, l1=64, l2=64):
    """Static row/lane layout of the packed parameter slab (all widths = W lanes)."""
    W = max(_round_up(2 * l1, 128), _round_up(2 * l2, 128),
            _round_up(n_action + 1, 128))
    L = _round_up(l_obs, 8)            # padded row count of the layer-1 weight
    r_b1 = L                           # bias rows each get an 8-row aligned slot
    r_w2 = r_b1 + 8
    r_b2 = r_w2 + W
    r_w3 = r_b2 + 8
    r_b3 = r_w3 + W
    rows = r_b3 + 8
    return dict(W=W, L=L, r_b1=r_b1, r_w2=r_w2, r_b2=r_b2,
                r_w3=r_w3, r_b3=r_b3, rows=rows)


def pack_params(params, l_obs, n_action, l1=64, l2=64):
    """Pack all weights/biases into one lane-dense (rows, 128) f32 slab.

    Layer-1:  [w1 | c_w1]                (l_obs, 2*l1)   fused, lane-concat
    Layer-2:  block-diag(w2, c_w2)       (2*l1, 2*l2)
    Heads:    block-diag(w_pi, w_v)      (2*l2, n_action+1)  -> lane-dense 128
    Done once at init time; the per-call kernel only slices this slab.
    """
    lay = _layout(l_obs, n_action, l1, l2)
    W = lay["W"]
    slab = jnp.zeros((lay["rows"], W), jnp.float32)

    # layer 1 (fused)
    slab = slab.at[0:l_obs, 0:l1].set(params["w1"])
    slab = slab.at[0:l_obs, l1:2 * l1].set(params["c_w1"])
    slab = slab.at[lay["r_b1"], 0:l1].set(params["b1"])
    slab = slab.at[lay["r_b1"], l1:2 * l1].set(params["c_b1"])

    # layer 2 (block-diagonal)
    r = lay["r_w2"]
    slab = slab.at[r:r + l1, 0:l2].set(params["w2"])
    slab = slab.at[r + l1:r + 2 * l1, l2:2 * l2].set(params["c_w2"])
    slab = slab.at[lay["r_b2"], 0:l2].set(params["b2"])
    slab = slab.at[lay["r_b2"], l2:2 * l2].set(params["c_b2"])

    # heads (block-diagonal, lane-dense output)
    r = lay["r_w3"]
    slab = slab.at[r:r + l2, 0:n_action].set(params["w_pi"])
    slab = slab.at[r + l2:r + 2 * l2, n_action:n_action + 1].set(params["w_v"])
    slab = slab.at[lay["r_b3"], 0:n_action].set(params["b_pi"])
    slab = slab.at[lay["r_b3"], n_action:n_action + 1].set(params["b_v"])

    return dict(slab=slab, l_obs=l_obs, n_action=n_action, l1=l1, l2=l2, **lay)


def actor_net_forward(x, packed):
    """x: (B, l_obs) f32.  packed: result of pack_params.  Returns (pi, v)."""
    B, l_obs = x.shape
    assert l_obs == packed["l_obs"]
    W = packed["W"]
    n_action = packed["n_action"]
    r_b1, r_w2, r_b2 = packed["r_b1"], packed["r_w2"], packed["r_b2"]
    r_w3, r_b3 = packed["r_w3"], packed["r_b3"]
    slab = packed["slab"]
    rows = packed["rows"]

    def kernel(x_ref, p_ref, o_ref):
        xv = x_ref[...]
        # fused layer 1: (B, l_obs) @ (l_obs, 128)
        w1 = p_ref[pl.ds(0, l_obs), :]
        b1 = p_ref[pl.ds(r_b1, 1), :]
        h1 = jnp.maximum(
            jnp.dot(xv, w1, preferred_element_type=jnp.float32) + b1, 0.0)
        # fused (block-diagonal) layer 2: (B, 128) @ (128, 128)
        w2 = p_ref[pl.ds(r_w2, W), :]
        b2 = p_ref[pl.ds(r_b2, 1), :]
        h2 = jnp.maximum(
            jnp.dot(h1, w2, preferred_element_type=jnp.float32) + b2, 0.0)
        # fused heads: (B, 128) @ (128, 128); pi in lanes [0,n_action), v in lane n_action
        w3 = p_ref[pl.ds(r_w3, W), :]
        b3 = p_ref[pl.ds(r_b3, 1), :]
        o_ref[...] = jnp.dot(h2, w3, preferred_element_type=jnp.float32) + b3

    # Tile the batch only when it is large (amortizes per-call cost and lets
    # v7x shard grid steps across its 2 TensorCores). Small B: one resident block.
    if B >= 128 and B % 128 == 0:
        tile_b = 128
    else:
        tile_b = B
    nb = B // tile_b

    out = pl.pallas_call(
        kernel,
        out_shape=jax.ShapeDtypeStruct((B, W), jnp.float32),
        grid=(nb,),
        in_specs=[
            pl.BlockSpec((tile_b, l_obs), lambda i: (i, 0)),
            pl.BlockSpec((rows, W), lambda i: (0, 0)),   # slab stays resident
        ],
        out_specs=pl.BlockSpec((tile_b, W), lambda i: (i, 0)),
        compiler_params=pltpu.CompilerParams(
            dimension_semantics=("parallel",)),
    )(x, slab)

    pi = out[:, :n_action]
    v = out[:, n_action:n_action + 1]
    return pi, v


def init_params(key, l_obs, n_action, l1=64, l2=64):
    """Deterministic init matching PyTorch nn.Linear default (uniform +-1/sqrt(fan_in))."""
    def linear(k, fan_in, fan_out):
        kw, kb = jax.random.split(k)
        bound = 1.0 / jnp.sqrt(jnp.float32(fan_in))
        w = jax.random.uniform(kw, (fan_in, fan_out), jnp.float32, -bound, bound)
        b = jax.random.uniform(kb, (fan_out,), jnp.float32, -bound, bound)
        return w, b

    keys = jax.random.split(key, 6)
    w1, b1 = linear(keys[0], l_obs, l1)
    w2, b2 = linear(keys[1], l1, l2)
    w_pi, b_pi = linear(keys[2], l2, n_action)
    c_w1, c_b1 = linear(keys[3], l_obs, l1)
    c_w2, c_b2 = linear(keys[4], l1, l2)
    w_v, b_v = linear(keys[5], l2, 1)
    return dict(w1=w1, b1=b1, w2=w2, b2=b2, w_pi=w_pi, b_pi=b_pi,
                c_w1=c_w1, c_b1=c_b1, c_w2=c_w2, c_b2=c_b2, w_v=w_v, b_v=b_v)


def reference_forward(x, p):
    """Pure-JAX reference mirroring the PyTorch forward."""
    z1 = jax.nn.relu(x @ p["w1"] + p["b1"])
    z2 = jax.nn.relu(z1 @ p["w2"] + p["b2"])
    pi = z2 @ p["w_pi"] + p["b_pi"]
    c1 = jax.nn.relu(x @ p["c_w1"] + p["c_b1"])
    c2 = jax.nn.relu(c1 @ p["c_w2"] + p["c_b2"])
    v = c2 @ p["w_v"] + p["b_v"]
    return pi, v


if __name__ == "__main__":
    # Small shapes consistent with the module: obs dim 32, 8 actions, batch 8.
    B, L_OBS, N_ACTION = 8, 32, 8

    key = jax.random.PRNGKey(0)
    k_x, k_p, k_xb = jax.random.split(key, 3)
    x = jax.random.normal(k_x, (B, L_OBS), dtype=jnp.float32)
    params = init_params(k_p, L_OBS, N_ACTION, l1=64, l2=64)
    packed = pack_params(params, L_OBS, N_ACTION, l1=64, l2=64)  # one-time packing

    # Small-batch path (single resident block).
    pi_out, v_out = actor_net_forward(x, packed)
    jax.block_until_ready((pi_out, v_out))
    pi_ref, v_ref = reference_forward(x, params)
    assert pi_out.shape == (B, N_ACTION) and v_out.shape == (B, 1)
    assert jnp.allclose(pi_out, pi_ref, atol=1e-4, rtol=1e-4)
    assert jnp.allclose(v_out, v_ref, atol=1e-4, rtol=1e-4)

    # Large-batch path (tiled over the batch grid axis, megacore-parallel).
    BB = 256
    xb = jax.random.normal(k_xb, (BB, L_OBS), dtype=jnp.float32)
    pi_b, v_b = actor_net_forward(xb, packed)
    jax.block_until_ready((pi_b, v_b))
    pi_bref, v_bref = reference_forward(xb, params)
    assert jnp.allclose(pi_b, pi_bref, atol=1e-4, rtol=1e-4)
    assert jnp.allclose(v_b, v_bref, atol=1e-4, rtol=1e-4)

    print("KERNEL_OK")
</pallas_src>

<mosaic_0001>
module attributes {stable_mosaic.version = 11 : i64} {
  func.func @kernel(%arg0: i32, %arg1: memref<8x32xf32, #tpu.memory_space<vmem>>, %arg2: memref<312x128xf32, #tpu.memory_space<vmem>>, %arg3: memref<8x128xf32, #tpu.memory_space<vmem>>) attributes {dimension_semantics = [#tpu.dimension_semantics<parallel>], iteration_bounds = array<i64: 1>, scalar_prefetch = 0 : i64, scratch_operands = 0 : i64, tpu.core_type = #tpu.core_type<tc>, window_params = [{transform_indices = @transform_0, window_bounds = array<i64: 8, 32>}, {pipeline_mode = #tpu.pipeline_mode<synchronous>, transform_indices = @transform_1, window_bounds = array<i64: 312, 128>}, {transform_indices = @transform_2, window_bounds = array<i64: 8, 128>}]} {
    %c0 = arith.constant 0 : index
    %c0_0 = arith.constant 0 : index
    %0 = vector.load %arg1[%c0, %c0_0] : memref<8x32xf32, #tpu.memory_space<vmem>>, vector<8x32xf32>
    %c0_1 = arith.constant 0 : index
    %c0_2 = arith.constant 0 : index
    %1 = vector.load %arg2[%c0_1, %c0_2] : memref<312x128xf32, #tpu.memory_space<vmem>>, vector<32x128xf32>
    %c32 = arith.constant 32 : index
    %c0_3 = arith.constant 0 : index
    %2 = vector.load %arg2[%c32, %c0_3] : memref<312x128xf32, #tpu.memory_space<vmem>>, vector<1x128xf32>
    %cst = arith.constant dense<0.000000e+00> : vector<8x128xf32>
    %3 = tpu.matmul %0, %1, %cst {dimension_numbers = #tpu.dot_dimension_numbers<[1], [0], [0], [1], [0, 0, 1, 1], [], []>} : vector<8x32xf32>, vector<32x128xf32>, vector<8x128xf32> -> vector<8x128xf32>
    %4 = vector.broadcast %2 : vector<1x128xf32> to vector<8x128xf32>
    %5 = arith.addf %3, %4 : vector<8x128xf32>
    %cst_4 = arith.constant 0.000000e+00 : f32
    %6 = vector.broadcast %cst_4 : f32 to vector<8x128xf32>
    %7 = arith.maximumf %5, %6 : vector<8x128xf32>
    %c40 = arith.constant 40 : index
    %c0_5 = arith.constant 0 : index
    %8 = vector.load %arg2[%c40, %c0_5] : memref<312x128xf32, #tpu.memory_space<vmem>>, vector<128x128xf32>
    %c168 = arith.constant 168 : index
    %c0_6 = arith.constant 0 : index
    %9 = vector.load %arg2[%c168, %c0_6] : memref<312x128xf32, #tpu.memory_space<vmem>>, vector<1x128xf32>
    %cst_7 = arith.constant dense<0.000000e+00> : vector<8x128xf32>
    %10 = tpu.matmul %7, %8, %cst_7 {dimension_numbers = #tpu.dot_dimension_numbers<[1], [0], [0], [1], [0, 0, 1, 1], [], []>} : vector<8x128xf32>, vector<128x128xf32>, vector<8x128xf32> -> vector<8x128xf32>
    %11 = vector.broadcast %9 : vector<1x128xf32> to vector<8x128xf32>
    %12 = arith.addf %10, %11 : vector<8x128xf32>
    %cst_8 = arith.constant 0.000000e+00 : f32
    %13 = vector.broadcast %cst_8 : f32 to vector<8x128xf32>
    %14 = arith.maximumf %12, %13 : vector<8x128xf32>
    %c176 = arith.constant 176 : index
    %c0_9 = arith.constant 0 : index
    %15 = vector.load %arg2[%c176, %c0_9] : memref<312x128xf32, #tpu.memory_space<vmem>>, vector<128x128xf32>
    %c304 = arith.constant 304 : index
    %c0_10 = arith.constant 0 : index
    %16 = vector.load %arg2[%c304, %c0_10] : memref<312x128xf32, #tpu.memory_space<vmem>>, vector<1x128xf32>
    %cst_11 = arith.constant dense<0.000000e+00> : vector<8x128xf32>
    %17 = tpu.matmul %14, %15, %cst_11 {dimension_numbers = #tpu.dot_dimension_numbers<[1], [0], [0], [1], [0, 0, 1, 1], [], []>} : vector<8x128xf32>, vector<128x128xf32>, vector<8x128xf32> -> vector<8x128xf32>
    %18 = vector.broadcast %16 : vector<1x128xf32> to vector<8x128xf32>
    %19 = arith.addf %17, %18 : vector<8x128xf32>
    %c0_12 = arith.constant 0 : index
    %c0_13 = arith.constant 0 : index
    %20 = vector.load %arg3[%c0_12, %c0_13] : memref<8x128xf32, #tpu.memory_space<vmem>>, vector<8x128xf32>
    tpu.vector_store %arg3[%c0_12, %c0_13], %19 {strides = array<i32>} : memref<8x128xf32, #tpu.memory_space<vmem>>, vector<8x128xf32>,
    return
  }
  func.func @transform_0(%arg0: i32) -> (i32, i32) {
    %c0_i32 = arith.constant 0 : i32
    %c0_i32_0 = arith.constant 0 : i32
    return %arg0, %c0_i32 : i32, i32
  }
  func.func @transform_1(%arg0: i32) -> (i32, i32) {
    %c0_i32 = arith.constant 0 : i32
    %c0_i32_0 = arith.constant 0 : i32
    %c0_i32_1 = arith.constant 0 : i32
    return %c0_i32, %c0_i32_0 : i32, i32
  }
  func.func @transform_2(%arg0: i32) -> (i32, i32) {
    %c0_i32 = arith.constant 0 : i32
    %c0_i32_0 = arith.constant 0 : i32
    return %arg0, %c0_i32 : i32, i32
  }
}

</mosaic_0001>

<llo_original>
// kernel: tpu_custom_call.1
$region0: #{tpu_custom_call.1}
  #allocation0 [shape = 'u32[]', space=smem, size = 0x4, offset = 0x4, fixed_abs, tag = 'smem constant byte address 0x4 - core index']
  #allocation1 [shape = 'u32[144,128]{1,0:T(1,128)}', space=vmem, size = 0x12000, scoped, tag = 'internal scratch']
  %s0 = inlined_call_operand.hbm [shape: f32[8,32], index: 0, kind: input, shape index: {}]
  %s1 = inlined_call_operand.hbm [shape: f32[312,128], index: 1, kind: input, shape index: {}]
  %s2 = inlined_call_operand.hbm [shape: f32[8,128], index: 2, kind: output, shape index: {}]
  %s3 = sld [smem:[#allocation0]]
  $region26: #{tpu_custom_call.1} parent=0
    _
  %s5 = ssub.s32 1, %s3
  %s6 = scalar_select 0, %s5, %s3
  $region1: #{tpu_custom_call.1} parent=0
    #allocation2 [shape = 'u8[4096]{0}', space=vmem, size = 0x1000, scoped, tag = 'input window, operand 0, single buffered']
    #allocation3 [shape = 's32[1]{0}', space=sflag, size = 0x4, scoped, tag = 'scoped memory for tpu_custom_call.1']
    #allocation4 [shape = 's32[1]{0}', space=sflag, size = 0x4, scoped, tag = 'scoped memory for tpu_custom_call.1']
    #allocation5 [shape = 'u8[159744]{0}', space=vmem, size = 0x27000, scoped, tag = 'input window, operand 1, single buffered']
    #allocation6 [shape = 's32[1]{0}', space=sflag, size = 0x4, scoped, tag = 'scoped memory for tpu_custom_call.1']
    #allocation7 [shape = 'u8[4096]{0}', space=vmem, size = 0x1000, scoped, tag = 'output window, operand 0, single buffered']
    %7 = vsyncpa [#allocation3], 0
    %8 = vsyncpa [#allocation6], 0
    %9 = vsyncpa [#allocation4], 0
    // Predicated region
    $region2: #{tpu_custom_call.1} parent=1 // pred_check
      _
    $region3: #{tpu_custom_call.1} parent=1 // pred_check_branch
      %11 = sbr.rel (0) target = $region5
    $region4: #{tpu_custom_call.1} parent=1 // pred_region
      %s13 = ssub.s32 128, 128
      %14 = vsyncadd [#allocation3], %s13
      %s16 = sshll.u32 [#allocation2], 4
      %s17 = int_to_ptr.vmem [resolvable:$true] %s16
      %19 = dma.hbm_to_vmem [thread:$0]  %s0, 128, %s17, [#allocation3]
    $region5: #{tpu_custom_call.1} parent=1 // pred_fallthru
      _
    // Predicated region
    $region6: #{tpu_custom_call.1} parent=1 // pred_check
      _
    $region7: #{tpu_custom_call.1} parent=1 // pred_check_branch
      %21 = sbr.rel (0) target = $region9
    $region8: #{tpu_custom_call.1} parent=1 // pred_region
      %s23 = ssub.s32 4992, 4992
      %24 = vsyncadd [#allocation6], %s23
      %s25 = sshll.u32 [#allocation5], 4
      %s26 = int_to_ptr.vmem [resolvable:$true] %s25
      %31 = dma.hbm_to_vmem [thread:$0]  %s1, 4992, %s26, [#allocation6], 128, 128, 8
    $region9: #{tpu_custom_call.1} parent=1 // pred_fallthru
      _
    // Predicated region
    $region10: #{tpu_custom_call.1} parent=1 // pred_check
      _
    $region11: #{tpu_custom_call.1} parent=1 // pred_check_branch
      %33 = sbr.rel (0) target = $region13
    $region12: #{tpu_custom_call.1} parent=1 // pred_region
      %34 = dma.done [#allocation3], 128
    $region13: #{tpu_custom_call.1} parent=1 // pred_fallthru
      _
    // Predicated region
    $region14: #{tpu_custom_call.1} parent=1 // pred_check
      _
    $region15: #{tpu_custom_call.1} parent=1 // pred_check_branch
      %36 = sbr.rel (0) target = $region17
    $region16: #{tpu_custom_call.1} parent=1 // pred_region
      %37 = dma.done [#allocation6], 4992
    $region17: #{tpu_custom_call.1} parent=1 // pred_fallthru
      _
    %v38 = vld [vmem:[#allocation2] sm:$0xff]
    %v39 = vld [vmem:[#allocation5] sm:$0xff]
    %v40 = vld [vmem:[#allocation5 + $0x8] sm:$0xff]
    %v41 = vld [vmem:[#allocation5 + $0x10] sm:$0xff]
    %v42 = vld [vmem:[#allocation5 + $0x18] sm:$0xff]
    %v43 = vld [vmem:[#allocation5 + $0x20] sm:$0x1]
    %v44 = vlaneseq
    %v45 = vshrl.u32 %v44, 7
    %v46 = vsub.s32 0, %v45
    %v47 = vrot.slane %v43, %v46
    %vm48 = vcmask 261120
    %v50 = vsel %vm48, %v38, 0
    %52 = vmatprep.subr.mxu0 0.0
    %53 = vmatpush1.msra.mxu0 0.0
    %54 = vmatprep.subr.mxu0 0.0
    %55 = vmatpush1.msra.mxu0 0.0
    %56 = vmatprep.subr.mxu0 0.0
    %57 = vmatpush1.msra.mxu0 0.0
    %58 = vmatprep.subr.mxu0 0.0
    %59 = vmatpush1.msra.mxu0 0.0
    %60 = vmatprep.subr.mxu0 0.0
    %61 = vmatpush1.msra.mxu0 0.0
    %62 = vmatprep.subr.mxu0 0.0
    %63 = vmatpush1.msra.mxu0 0.0
    %64 = vmatprep.subr.mxu0 0.0
    %65 = vmatpush1.msra.mxu0 0.0
    %66 = vmatprep.subr.mxu0 0.0
    %67 = vmatpush1.msra.mxu0 0.0
    %68 = vmatprep.subr.mxu0 0.0
    %69 = vmatpush1.msra.mxu0 0.0
    %70 = vmatprep.subr.mxu0 0.0
    %71 = vmatpush1.msra.mxu0 0.0
    %72 = vmatprep.subr.mxu0 0.0
    %73 = vmatpush1.msra.mxu0 0.0
    %74 = vmatprep.subr.mxu0 0.0
    %75 = vmatpush1.msra.mxu0 0.0
    %76 = vmatprep.subr.mxu0 0.0
    %77 = vmatpush1.msra.mxu0 %v42
    %78 = vmatprep.subr.mxu0 0.0
    %79 = vmatpush1.msra.mxu0 %v41
    %80 = vmatprep.subr.mxu0 0.0
    %81 = vmatpush1.msra.mxu0 %v40
    %82 = vmatprep.subr.mxu0 0.0
    %83 = vmatpush1.msra.mxu0 %v39
    %84 = vmatprep.subr.mxu0 0.0
    %85 = vmatpush2.msra.mxu0 0.0
    %86 = vmatprep.subr.mxu0 0.0
    %87 = vmatpush2.msra.mxu0 0.0
    %88 = vmatprep.subr.mxu0 0.0
    %89 = vmatpush2.msra.mxu0 0.0
    %90 = vmatprep.subr.mxu0 0.0
    %91 = vmatpush2.msra.mxu0 0.0
    %92 = vmatprep.subr.mxu0 0.0
    %93 = vmatpush2.msra.mxu0 0.0
    %94 = vmatprep.subr.mxu0 0.0
    %95 = vmatpush2.msra.mxu0 0.0
    %96 = vmatprep.subr.mxu0 0.0
    %97 = vmatpush2.msra.mxu0 0.0
    %98 = vmatprep.subr.mxu0 0.0
    %99 = vmatpush2.msra.mxu0 0.0
    %100 = vmatprep.subr.mxu0 0.0
    %101 = vmatpush2.msra.mxu0 0.0
    %102 = vmatprep.subr.mxu0 0.0
    %103 = vmatpush2.msra.mxu0 0.0
    %104 = vmatprep.subr.mxu0 0.0
    %105 = vmatpush2.msra.mxu0 0.0
    %106 = vmatprep.subr.mxu0 0.0
    %107 = vmatpush2.msra.mxu0 0.0
    %108 = vmatprep.subr.mxu0 0.0
    %109 = vmatpush2.msra.mxu0 0.0
    %110 = vmatprep.subr.mxu0 0.0
    %111 = vmatpush2.msra.mxu0 0.0
    %112 = vmatprep.subr.mxu0 0.0
    %113 = vmatpush2.msra.mxu0 0.0
    %114 = vmatprep.subr.mxu0 0.0
    %115 = vmatpush2.msra.mxu0 0.0
    %116 = vmatprep.mubr.f32.mxu0 0.0
    %117 = vmatmul.mubr.f32.gmra.mxu0 %v50
    %v118 = vpop.f32.mrf.mxu0
    %v119 = vadd.f32 %v47, %v118
    %v120 = vpop.f32.mrf.mxu0
    %121 = vdwg.mxu0
    %v122 = vmax.f32 %v119, 0.0
    %v123 = vld [vmem:[#allocation5 + $0x28] sm:$0xff]
    %v124 = vld [vmem:[#allocation5 + $0x30] sm:$0xff]
    %v125 = vld [vmem:[#allocation5 + $0x38] sm:$0xff]
    %v126 = vld [vmem:[#allocation5 + $0x40] sm:$0xff]
    %v127 = vld [vmem:[#allocation5 + $0x48] sm:$0xff]
    %v128 = vld [vmem:[#allocation5 + $0x50] sm:$0xff]
    %v129 = vld [vmem:[#allocation5 + $0x58] sm:$0xff]
    %v130 = vld [vmem:[#allocation5 + $0x60] sm:$0xff]
    %v131 = vld [vmem:[#allocation5 + $0x68] sm:$0xff]
    %v132 = vld [vmem:[#allocation5 + $0x70] sm:$0xff]
    %v133 = vld [vmem:[#allocation5 + $0x78] sm:$0xff]
    %v134 = vld [vmem:[#allocation5 + $0x80] sm:$0xff]
    %v135 = vld [vmem:[#allocation5 + $0x88] sm:$0xff]
    %v136 = vld [vmem:[#allocation5 + $0x90] sm:$0xff]
    %v137 = vld [vmem:[#allocation5 + $0x98] sm:$0xff]
    %v138 = vld [vmem:[#allocation5 + $0xa0] sm:$0xff]
    %v139 = vld [vmem:[#allocation5 + $0xa8] sm:$0x1]
    %v140 = vlaneseq
    %v141 = vshrl.u32 %v140, 7
    %v142 = vsub.s32 0, %v141
    %v143 = vrot.slane %v139, %v142
    %144 = vmatprep.subr.mxu0 0.0
    %145 = vmatpush1.msra.mxu0 %v138
    %146 = vmatprep.subr.mxu0 0.0
    %147 = vmatpush1.msra.mxu0 %v137
    %148 = vmatprep.subr.mxu0 0.0
    %149 = vmatpush1.msra.mxu0 %v136
    %150 = vmatprep.subr.mxu0 0.0
    %151 = vmatpush1.msra.mxu0 %v135
    %152 = vmatprep.subr.mxu0 0.0
    %153 = vmatpush1.msra.mxu0 %v134
    %154 = vmatprep.subr.mxu0 0.0
    %155 = vmatpush1.msra.mxu0 %v133
    %156 = vmatprep.subr.mxu0 0.0
    %157 = vmatpush1.msra.mxu0 %v132
    %158 = vmatprep.subr.mxu0 0.0
    %159 = vmatpush1.msra.mxu0 %v131
    %160 = vmatprep.subr.mxu0 0.0
    %161 = vmatpush1.msra.mxu0 %v130
    %162 = vmatprep.subr.mxu0 0.0
    %163 = vmatpush1.msra.mxu0 %v129
    %164 = vmatprep.subr.mxu0 0.0
    %165 = vmatpush1.msra.mxu0 %v128
    %166 = vmatprep.subr.mxu0 0.0
    %167 = vmatpush1.msra.mxu0 %v127
    %168 = vmatprep.subr.mxu0 0.0
    %169 = vmatpush1.msra.mxu0 %v126
    %170 = vmatprep.subr.mxu0 0.0
    %171 = vmatpush1.msra.mxu0 %v125
    %172 = vmatprep.subr.mxu0 0.0
    %173 = vmatpush1.msra.mxu0 %v124
    %174 = vmatprep.subr.mxu0 0.0
    %175 = vmatpush1.msra.mxu0 %v123
    %176 = vmatprep.subr.mxu0 0.0
    %177 = vmatpush2.msra.mxu0 0.0
    %178 = vmatprep.subr.mxu0 0.0
    %179 = vmatpush2.msra.mxu0 0.0
    %180 = vmatprep.subr.mxu0 0.0
    %181 = vmatpush2.msra.mxu0 0.0
    %182 = vmatprep.subr.mxu0 0.0
    %183 = vmatpush2.msra.mxu0 0.0
    %184 = vmatprep.subr.mxu0 0.0
    %185 = vmatpush2.msra.mxu0 0.0
    %186 = vmatprep.subr.mxu0 0.0
    %187 = vmatpush2.msra.mxu0 0.0
    %188 = vmatprep.subr.mxu0 0.0
    %189 = vmatpush2.msra.mxu0 0.0
    %190 = vmatprep.subr.mxu0 0.0
    %191 = vmatpush2.msra.mxu0 0.0
    %192 = vmatprep.subr.mxu0 0.0
    %193 = vmatpush2.msra.mxu0 0.0
    %194 = vmatprep.subr.mxu0 0.0
    %195 = vmatpush2.msra.mxu0 0.0
    %196 = vmatprep.subr.mxu0 0.0
    %197 = vmatpush2.msra.mxu0 0.0
    %198 = vmatprep.subr.mxu0 0.0
    %199 = vmatpush2.msra.mxu0 0.0
    %200 = vmatprep.subr.mxu0 0.0
    %201 = vmatpush2.msra.mxu0 0.0
    %202 = vmatprep.subr.mxu0 0.0
    %203 = vmatpush2.msra.mxu0 0.0
    %204 = vmatprep.subr.mxu0 0.0
    %205 = vmatpush2.msra.mxu0 0.0
    %206 = vmatprep.subr.mxu0 0.0
    %207 = vmatpush2.msra.mxu0 0.0
    %208 = vmatprep.mubr.f32.mxu0 0.0
    %209 = vmatmul.mubr.f32.gmra.mxu0 %v122
    %v210 = vpop.f32.mrf.mxu0
    %v211 = vadd.f32 %v143, %v210
    %v212 = vpop.f32.mrf.mxu0
    %213 = vdwg.mxu0
    %v214 = vmax.f32 %v211, 0.0
    %v215 = vld [vmem:[#allocation5 + $0xb0] sm:$0xff]
    %v216 = vld [vmem:[#allocation5 + $0xb8] sm:$0xff]
    %v217 = vld [vmem:[#allocation5 + $0xc0] sm:$0xff]
    %v218 = vld [vmem:[#allocation5 + $0xc8] sm:$0xff]
    %v219 = vld [vmem:[#allocation5 + $0xd0] sm:$0xff]
    %v220 = vld [vmem:[#allocation5 + $0xd8] sm:$0xff]
    %v221 = vld [vmem:[#allocation5 + $0xe0] sm:$0xff]
    %v222 = vld [vmem:[#allocation5 + $0xe8] sm:$0xff]
    %v223 = vld [vmem:[#allocation5 + $0xf0] sm:$0xff]
    %v224 = vld [vmem:[#allocation5 + $0xf8] sm:$0xff]
    %v225 = vld [vmem:[#allocation5 + $0x100] sm:$0xff]
    %v226 = vld [vmem:[#allocation5 + $0x108] sm:$0xff]
    %v227 = vld [vmem:[#allocation5 + $0x110] sm:$0xff]
    %v228 = vld [vmem:[#allocation5 + $0x118] sm:$0xff]
    %v229 = vld [vmem:[#allocation5 + $0x120] sm:$0xff]
    %v230 = vld [vmem:[#allocation5 + $0x128] sm:$0xff]
    %v231 = vld [vmem:[#allocation5 + $0x130] sm:$0x1]
    %v232 = vlaneseq
    %v233 = vshrl.u32 %v232, 7
    %v234 = vsub.s32 0, %v233
    %v235 = vrot.slane %v231, %v234
    %236 = vmatprep.subr.mxu0 0.0
    %237 = vmatpush1.msra.mxu0 %v230
    %238 = vmatprep.subr.mxu0 0.0
    %239 = vmatpush1.msra.mxu0 %v229
    %240 = vmatprep.subr.mxu0 0.0
    %241 = vmatpush1.msra.mxu0 %v228
    %242 = vmatprep.subr.mxu0 0.0
    %243 = vmatpush1.msra.mxu0 %v227
    %244 = vmatprep.subr.mxu0 0.0
    %245 = vmatpush1.msra.mxu0 %v226
    %246 = vmatprep.subr.mxu0 0.0
    %247 = vmatpush1.msra.mxu0 %v225
    %248 = vmatprep.subr.mxu0 0.0
    %249 = vmatpush1.msra.mxu0 %v224
    %250 = vmatprep.subr.mxu0 0.0
    %251 = vmatpush1.msra.mxu0 %v223
    %252 = vmatprep.subr.mxu0 0.0
    %253 = vmatpush1.msra.mxu0 %v222
    %254 = vmatprep.subr.mxu0 0.0
    %255 = vmatpush1.msra.mxu0 %v221
    %256 = vmatprep.subr.mxu0 0.0
    %257 = vmatpush1.msra.mxu0 %v220
    %258 = vmatprep.subr.mxu0 0.0
    %259 = vmatpush1.msra.mxu0 %v219
    %260 = vmatprep.subr.mxu0 0.0
    %261 = vmatpush1.msra.mxu0 %v218
    %262 = vmatprep.subr.mxu0 0.0
    %263 = vmatpush1.msra.mxu0 %v217
    %264 = vmatprep.subr.mxu0 0.0
    %265 = vmatpush1.msra.mxu0 %v216
    %266 = vmatprep.subr.mxu0 0.0
    %267 = vmatpush1.msra.mxu0 %v215
    %268 = vmatprep.subr.mxu0 0.0
    %269 = vmatpush2.msra.mxu0 0.0
    %270 = vmatprep.subr.mxu0 0.0
    %271 = vmatpush2.msra.mxu0 0.0
    %272 = vmatprep.subr.mxu0 0.0
    %273 = vmatpush2.msra.mxu0 0.0
    %274 = vmatprep.subr.mxu0 0.0
    %275 = vmatpush2.msra.mxu0 0.0
    %276 = vmatprep.subr.mxu0 0.0
    %277 = vmatpush2.msra.mxu0 0.0
    %278 = vmatprep.subr.mxu0 0.0
    %279 = vmatpush2.msra.mxu0 0.0
    %280 = vmatprep.subr.mxu0 0.0
    %281 = vmatpush2.msra.mxu0 0.0
    %282 = vmatprep.subr.mxu0 0.0
    %283 = vmatpush2.msra.mxu0 0.0
    %284 = vmatprep.subr.mxu0 0.0
    %285 = vmatpush2.msra.mxu0 0.0
    %286 = vmatprep.subr.mxu0 0.0
    %287 = vmatpush2.msra.mxu0 0.0
    %288 = vmatprep.subr.mxu0 0.0
    %289 = vmatpush2.msra.mxu0 0.0
    %290 = vmatprep.subr.mxu0 0.0
    %291 = vmatpush2.msra.mxu0 0.0
    %292 = vmatprep.subr.mxu0 0.0
    %293 = vmatpush2.msra.mxu0 0.0
    %294 = vmatprep.subr.mxu0 0.0
    %295 = vmatpush2.msra.mxu0 0.0
    %296 = vmatprep.subr.mxu0 0.0
    %297 = vmatpush2.msra.mxu0 0.0
    %298 = vmatprep.subr.mxu0 0.0
    %299 = vmatpush2.msra.mxu0 0.0
    %300 = vmatprep.mubr.f32.mxu0 0.0
    %301 = vmatmul.mubr.f32.gmra.mxu0 %v214
    %v302 = vpop.f32.mrf.mxu0
    %v303 = vadd.f32 %v235, %v302
    %v304 = vpop.f32.mrf.mxu0
    %305 = vdwg.mxu0
    %306 = vst [vmem:[#allocation7] sm:$0xff] %v303
    // Predicated region
    $region18: #{tpu_custom_call.1} parent=1 // pred_check
      _
    $region19: #{tpu_custom_call.1} parent=1 // pred_check_branch
      %308 = sbr.rel (0) target = $region21
    $region20: #{tpu_custom_call.1} parent=1 // pred_region
      %s310 = ssub.s32 128, 128
      %311 = vsyncadd [#allocation4], %s310
      %s313 = sshll.u32 [#allocation7], 4
      %s314 = int_to_ptr.vmem [resolvable:$true] %s313
      %316 = dma.vmem_to_hbm [thread:$0]  %s314, 128, %s2, [#allocation4]
    $region21: #{tpu_custom_call.1} parent=1 // pred_fallthru
      _
    // Predicated region
    $region22: #{tpu_custom_call.1} parent=1 // pred_check
      _
    $region23: #{tpu_custom_call.1} parent=1 // pred_check_branch
      %318 = sbr.rel (0) target = $region25
    $region24: #{tpu_custom_call.1} parent=1 // pred_region
      %319 = dma.done [#allocation4], 128
    $region25: #{tpu_custom_call.1} parent=1 // pred_fallthru
      _
    %320 = vsyncpa [#allocation3], 1
    %321 = vsyncpa [#allocation6], 1
    %322 = vsyncpa [#allocation4], 1

</llo_original>
